<compile_context>
chip_gen: v6e
topology: v6e:2x2x1
jax: 0.10.0
libtpu: 0.0.40
codegen_flags: <defaults>
</compile_context>

<pallas_src>
import jax
import jax.numpy as jnp
from jax import lax
from jax.experimental import pallas as pl
from jax.experimental.pallas import tpu as pltpu


_EPS = 1e-12  # F.normalize default eps (applied to the L2 norm)


def _rmsnorm_kernel(x_ref, g_ref, o_ref):
    # x_ref: (1, C, rows, 128); g_ref: (1, C, 1, 1) already pre-scaled by sqrt(C).
    x = x_ref[...].astype(jnp.float32)
    g = g_ref[...].astype(jnp.float32)
    # Channel reduction over a leading axis -> C-1 dense VPU adds.
    sumsq = jnp.sum(x * x, axis=1, keepdims=True)            # (1, 1, rows, 128)
    # 1 / max(||x||, eps) == rsqrt(max(sumsq, eps^2)); rsqrt runs on the EUP,
    # removing the full-width divide.
    inv = lax.rsqrt(jnp.maximum(sumsq, _EPS * _EPS))
    o_ref[...] = (x * inv * g).astype(o_ref.dtype)


def _choose_rows(nrows, n_batch, C, itemsize, per_block_bytes=2 << 20):
    """Rows (of 128 lanes) per tile: as large as the VMEM budget allows
    (~2 MiB/block -> ~8 MiB with double-buffered in+out, safe under the
    v5e/v6e/v7x scoped limits), while keeping >= ~8 total grid steps so the
    pipeline / both v7x TensorCores stay fed."""
    if nrows <= 8:
        return nrows                                   # full spatial extent
    rows = per_block_bytes // (C * 128 * itemsize)
    rows = max(8, (min(rows, nrows) // 8) * 8)
    while rows > 64 and n_batch * (-(-nrows // rows)) < 8:
        rows = max(64, (rows // 2 // 8) * 8)
    return rows


def rmsnorm(x, g):
    """x: (N, C, H, W, D), g: (1, C, 1, 1, 1). Returns same shape/dtype as x."""
    N, C, H, W, D = x.shape
    S = H * W * D
    itemsize = jnp.dtype(x.dtype).itemsize

    nrows = -(-S // 128)                      # ceil(S / 128)
    rows = _choose_rows(nrows, N, C, itemsize)
    nrows_p = (-(-nrows // rows)) * rows      # pad rows to a multiple of the tile
    S_pad = nrows_p * 128

    x2 = x.reshape(N, C, S)
    if S_pad != S:
        # Zero padding is harmless: sumsq=0 -> inv=1/eps -> output 0, sliced off.
        x2 = jnp.pad(x2, ((0, 0), (0, 0), (0, S_pad - S)))
    x4 = x2.reshape(N, C, nrows_p, 128)

    # Fold the sqrt(C) rescale into the tiny per-channel gain (C elements)
    # instead of multiplying the full-size tensor inside the kernel.
    g2 = g.reshape(1, C, 1, 1).astype(jnp.float32) * (float(C) ** 0.5)

    grid = (N, nrows_p // rows)
    total = N * C * nrows_p * 128
    cost = pl.CostEstimate(
        flops=4 * total,                      # x*x, C-1 adds, *inv, *g
        transcendentals=N * nrows_p * 128,    # one rsqrt per spatial column
        bytes_accessed=2 * total * itemsize + C * 4,
    )

    out = pl.pallas_call(
        _rmsnorm_kernel,
        out_shape=jax.ShapeDtypeStruct((N, C, nrows_p, 128), x.dtype),
        grid=grid,
        in_specs=[
            pl.BlockSpec((1, C, rows, 128), lambda n, s: (n, 0, s, 0)),
            pl.BlockSpec((1, C, 1, 1), lambda n, s: (0, 0, 0, 0)),
        ],
        out_specs=pl.BlockSpec((1, C, rows, 128), lambda n, s: (n, 0, s, 0)),
        compiler_params=pltpu.CompilerParams(
            dimension_semantics=("parallel", "parallel"),
            vmem_limit_bytes=32 * 1024 * 1024,   # explicit: v5e default is 16 MiB
        ),
        cost_estimate=cost,
    )(x4, g2)

    out = out.reshape(N, C, S_pad)
    if S_pad != S:
        out = out[:, :, :S]
    return out.reshape(N, C, H, W, D)


def rmsnorm_reference(x, g):
    """Pure-JAX reference mirroring F.normalize(x, dim=1) * g * sqrt(C)."""
    C = x.shape[1]
    norm = jnp.sqrt(jnp.sum(x.astype(jnp.float32) ** 2, axis=1, keepdims=True))
    denom = jnp.maximum(norm, 1e-12)
    return (x / denom) * g * (C ** 0.5)


if __name__ == "__main__":
    key = jax.random.PRNGKey(0)
    kx, kg, kx2, kg2 = jax.random.split(key, 4)

    # Case 1: spatial size divisible by 128 (no padding path).
    N, C, H, W, D = 2, 4, 8, 8, 8
    x = jax.random.normal(kx, (N, C, H, W, D), dtype=jnp.float32)
    g = 1.0 + 0.1 * jax.random.normal(kg, (1, C, 1, 1, 1), dtype=jnp.float32)
    out = jax.block_until_ready(rmsnorm(x, g))
    ref = rmsnorm_reference(x, g)
    assert out.shape == x.shape
    assert jnp.allclose(out, ref, atol=1e-5, rtol=1e-5), "mismatch vs reference (case 1)"

    # Case 2: awkward spatial size (exercises the padded-tail path).
    N2, C2, H2, W2, D2 = 1, 6, 5, 6, 7
    x_b = jax.random.normal(kx2, (N2, C2, H2, W2, D2), dtype=jnp.float32)
    g_b = 1.0 + 0.1 * jax.random.normal(kg2, (1, C2, 1, 1, 1), dtype=jnp.float32)
    out_b = jax.block_until_ready(rmsnorm(x_b, g_b))
    ref_b = rmsnorm_reference(x_b, g_b)
    assert out_b.shape == x_b.shape
    assert jnp.allclose(out_b, ref_b, atol=1e-5, rtol=1e-5), "mismatch vs reference (case 2)"

    print("KERNEL_OK")
</pallas_src>

<mosaic_0001>
module attributes {stable_mosaic.version = 11 : i64} {
  func.func @_rmsnorm_kernel(%arg0: i32, %arg1: i32, %arg2: memref<1x4x4x128xf32, #tpu.memory_space<vmem>>, %arg3: memref<1x4x1x1xf32, #tpu.memory_space<vmem>>, %arg4: memref<1x4x4x128xf32, #tpu.memory_space<vmem>>) attributes {dimension_semantics = [#tpu.dimension_semantics<parallel>, #tpu.dimension_semantics<parallel>], iteration_bounds = array<i64: 2, 1>, scalar_prefetch = 0 : i64, scratch_operands = 0 : i64, tpu.core_type = #tpu.core_type<tc>, window_params = [{transform_indices = @transform_0, window_bounds = array<i64: 1, 4, 4, 128>}, {pipeline_mode = #tpu.pipeline_mode<synchronous>, transform_indices = @transform_1, window_bounds = array<i64: 1, 4, 1, 1>}, {transform_indices = @transform_2, window_bounds = array<i64: 1, 4, 4, 128>}]} {
    %c0 = arith.constant 0 : index
    %c0_0 = arith.constant 0 : index
    %c0_1 = arith.constant 0 : index
    %c0_2 = arith.constant 0 : index
    %0 = vector.load %arg2[%c0, %c0_0, %c0_1, %c0_2] : memref<1x4x4x128xf32, #tpu.memory_space<vmem>>, vector<1x4x4x128xf32>
    %c0_3 = arith.constant 0 : index
    %c0_4 = arith.constant 0 : index
    %c0_5 = arith.constant 0 : index
    %c0_6 = arith.constant 0 : index
    %1 = vector.load %arg3[%c0_3, %c0_4, %c0_5, %c0_6] : memref<1x4x1x1xf32, #tpu.memory_space<vmem>>, vector<1x4x1x1xf32>
    %2 = arith.mulf %0, %0 : vector<1x4x4x128xf32>
    %cst = arith.constant dense<0.000000e+00> : vector<1x4x128xf32>
    %3 = vector.multi_reduction <add>, %2, %cst [1] : vector<1x4x4x128xf32> to vector<1x4x128xf32>
    %4 = vector.shape_cast %3 : vector<1x4x128xf32> to vector<1x1x4x128xf32>
    %cst_7 = arith.constant 1.000000e-24 : f32
    %5 = vector.broadcast %cst_7 : f32 to vector<1x1x4x128xf32>
    %6 = arith.maximumf %4, %5 : vector<1x1x4x128xf32>
    %7 = math.rsqrt %6 : vector<1x1x4x128xf32>
    %8 = vector.broadcast %7 : vector<1x1x4x128xf32> to vector<1x4x4x128xf32>
    %9 = arith.mulf %0, %8 : vector<1x4x4x128xf32>
    %10 = vector.broadcast %1 : vector<1x4x1x1xf32> to vector<1x4x4x128xf32>
    %11 = arith.mulf %9, %10 : vector<1x4x4x128xf32>
    %c0_8 = arith.constant 0 : index
    %c0_9 = arith.constant 0 : index
    %c0_10 = arith.constant 0 : index
    %c0_11 = arith.constant 0 : index
    %12 = vector.load %arg4[%c0_8, %c0_9, %c0_10, %c0_11] : memref<1x4x4x128xf32, #tpu.memory_space<vmem>>, vector<1x4x4x128xf32>
    tpu.vector_store %arg4[%c0_8, %c0_9, %c0_10, %c0_11], %11 {strides = array<i32>} : memref<1x4x4x128xf32, #tpu.memory_space<vmem>>, vector<1x4x4x128xf32>,
    return
  }
  func.func @transform_0(%arg0: i32, %arg1: i32) -> (i32, i32, i32, i32) {
    %c0_i32 = arith.constant 0 : i32
    %c0_i32_0 = arith.constant 0 : i32
    %c0_i32_1 = arith.constant 0 : i32
    return %arg0, %c0_i32, %arg1, %c0_i32_0 : i32, i32, i32, i32
  }
  func.func @transform_1(%arg0: i32, %arg1: i32) -> (i32, i32, i32, i32) {
    %c0_i32 = arith.constant 0 : i32
    %c0_i32_0 = arith.constant 0 : i32
    %c0_i32_1 = arith.constant 0 : i32
    %c0_i32_2 = arith.constant 0 : i32
    %c0_i32_3 = arith.constant 0 : i32
    return %c0_i32, %c0_i32_0, %c0_i32_1, %c0_i32_2 : i32, i32, i32, i32
  }
  func.func @transform_2(%arg0: i32, %arg1: i32) -> (i32, i32, i32, i32) {
    %c0_i32 = arith.constant 0 : i32
    %c0_i32_0 = arith.constant 0 : i32
    %c0_i32_1 = arith.constant 0 : i32
    return %arg0, %c0_i32, %arg1, %c0_i32_0 : i32, i32, i32, i32
  }
}

</mosaic_0001>

<llo_original>
// kernel: tpu_custom_call.1
$region0: #{tpu_custom_call.1}
  #allocation0 [shape = 'u32[]', space=smem, size = 0x4, offset = 0x4, fixed_abs, tag = 'smem constant byte address 0x4 - core index']
  #allocation1 [shape = 'u32[144,128]{1,0:T(1,128)}', space=vmem, size = 0x12000, scoped, tag = 'internal scratch']
  %s0 = inlined_call_operand.hbm [shape: f32[2,4,4,128], index: 0, kind: input, shape index: {}]
  %s1 = inlined_call_operand.vmem [shape: f32[1,4,1,1], index: 1, kind: input, shape index: {}]
  %s2 = inlined_call_operand.hbm [shape: f32[2,4,4,128], index: 2, kind: output, shape index: {}]
  %s3 = sld [smem:[#allocation0]]
  $region45: #{tpu_custom_call.1} parent=0
    _
  %s5 = ssub.s32 1, %s3
  %s6 = scalar_select 0, %s5, %s3
  $region1: #{tpu_custom_call.1} parent=0
    #allocation2 [shape = 'u8[16384]{0}', space=vmem, size = 0x4000, scoped, tag = 'input window, operand 0']
    #allocation3 [shape = 's32[2]{0}', space=sflag, size = 0x8, scoped, tag = 'scoped memory for tpu_custom_call.1']
    #allocation4 [shape = 's32[2]{0}', space=sflag, size = 0x8, scoped, tag = 'scoped memory for tpu_custom_call.1']
    #allocation5 [shape = 'u8[16384]{0}', space=vmem, size = 0x4000, scoped, tag = 'output window, operand 0']
    %7 = vsyncpa [#allocation3], 0
    %s8 = scalar_lea.sflag [#allocation3], 1
    %9 = vsyncpa %s8, 0
    %10 = vsyncpa [#allocation4], 0
    %s11 = scalar_lea.sflag [#allocation4], 1
    %12 = vsyncpa %s11, 0
    loop: start=0, step=1, limit=4
    $region2: #{tpu_custom_call.1} parent=1 // loop_pre_header
      _
    $region3: #{tpu_custom_call.1} parent=1 // loop_header
      %s14 = sphi 0, %s18
      %p15 = scmp.ge.s32.totalorder %s14, 4
      %s21 = sphi 0, %s33
      %s22 = sphi 0, %s29
      %s23 = sphi 0, %s21
      %s24 = sphi 0, %s22
      %s25 = sphi 0, %s23
      %s26 = sphi 0, %s24
      %s38 = sphi 0, %s40
      %s41 = sphi 0, %s38
      %s42 = sphi 0, %s41
      %s58 = sphi 0, %s42
      %s62 = sphi 0, %s62
      %s64 = sphi 0, %s62
      %s65 = sphi 0, %s64
      %s79 = sphi 0, %s65
      %s87 = sphi 0, %s89
      %s90 = sphi 0, %s87
      %s91 = sphi 0, %s90
      %s107 = sphi 0, %s91
    $region4: #{tpu_custom_call.1} parent=1 // loop_header_branch
      %17 = sbr.rel (%p15) target = $region8
    $region5: #{tpu_custom_call.1} parent=1 // loop_body
      %s19 = ssub.s32 %s14, 1
      %s20 = ssub.s32 %s14, 2
      %s27 = sadd.s32 1, %s22
      %p28 = scmp.ge.s32.totalorder %s27, 1
      %s29 = scalar_select %p28, 0, %s27
      %s30 = sadd.s32 1, %s21
      %s31 = scalar_select %p28, %s30, %s21
      %p32 = scmp.ge.s32.totalorder %s31, 2
      %s33 = scalar_select %p32, 0, %s31
      %s34 = ssub.s32 %s21, %s33
      %s35 = ssub.s32 %s22, %s29
      %s36 = sor.u32 %s34, %s35
      %p37 = scmp.eq.s32.totalorder %s36, 0
      %s39 = sadd.s32 %s38, 1
      %s40 = scalar_select %p37, %s38, %s39
      %p43 = pneg %p37
      %p44 = scmp.eq.s32.totalorder %s14, 1
      %p45 = por %p43, %p44
      %p46 = scmp.ne.s32.totalorder %s38, %s41
      %p47 = scmp.eq.s32.totalorder %s14, 0
      %p48 = por %p46, %p47
      %p49 = scmp.ne.s32.totalorder %s38, %s41
      %p50 = scmp.eq.s32.totalorder %s19, 1
      %p51 = por %p49, %p50
      %p52 = scmp.ne.s32.totalorder %s41, %s42
      %p53 = scmp.eq.s32.totalorder %s19, 0
      %p54 = por %p52, %p53
      %p55 = scmp.ne.s32.totalorder %s41, %s42
      %p56 = scmp.eq.s32.totalorder %s20, 1
      %p57 = por %p55, %p56
      %p59 = scmp.ne.s32.totalorder %s42, %s58
      %p60 = scmp.eq.s32.totalorder %s20, 0
      %p61 = por %p59, %p60
      %s63 = sadd.s32 %s62, 1
      %p66 = scmp.eq.s32.totalorder %s14, 1
      %p67 = scmp.ne.s32.totalorder %s62, %s64
      %p68 = scmp.eq.s32.totalorder %s14, 0
      %p69 = por %p67, %p68
      %p70 = scmp.ne.s32.totalorder %s62, %s64
      %p71 = scmp.eq.s32.totalorder %s19, 1
      %p72 = por %p70, %p71
      %p73 = scmp.ne.s32.totalorder %s64, %s65
      %p74 = scmp.eq.s32.totalorder %s19, 0
      %p75 = por %p73, %p74
      %p76 = scmp.ne.s32.totalorder %s64, %s65
      %p77 = scmp.eq.s32.totalorder %s20, 1
      %p78 = por %p76, %p77
      %p80 = scmp.ne.s32.totalorder %s65, %s79
      %p81 = scmp.eq.s32.totalorder %s20, 0
      %p82 = por %p80, %p81
      %s83 = ssub.s32 %s21, %s33
      %s84 = ssub.s32 %s22, %s29
      %s85 = sor.u32 %s83, %s84
      %p86 = scmp.eq.s32.totalorder %s85, 0
      %s88 = sadd.s32 %s87, 1
      %s89 = scalar_select %p86, %s87, %s88
      %p92 = pneg %p86
      %p93 = scmp.eq.s32.totalorder %s14, 1
      %p94 = por %p92, %p93
      %p95 = scmp.ne.s32.totalorder %s87, %s90
      %p96 = scmp.eq.s32.totalorder %s14, 0
      %p97 = por %p95, %p96
      %p98 = scmp.ne.s32.totalorder %s87, %s90
      %p99 = scmp.eq.s32.totalorder %s19, 1
      %p100 = por %p98, %p99
      %p101 = scmp.ne.s32.totalorder %s90, %s91
      %p102 = scmp.eq.s32.totalorder %s19, 0
      %p103 = por %p101, %p102
      %p104 = scmp.ne.s32.totalorder %s90, %s91
      %p105 = scmp.eq.s32.totalorder %s20, 1
      %p106 = por %p104, %p105
      %p108 = scmp.ne.s32.totalorder %s91, %s107
      %p109 = scmp.eq.s32.totalorder %s20, 0
      %p110 = por %p108, %p109
      %p111 = scmp.le.s32.totalorder 1, %s14
      %p112 = scmp.lt.s32.totalorder %s14, 3
      %p113 = pnand %p111, %p112
      %p114 = pneg %p113
      // Predicated region
      $region9: #{tpu_custom_call.1} parent=5 // pred_check
        _
      $region10: #{tpu_custom_call.1} parent=5 // pred_check_branch
        %116 = sbr.rel (%p113) target = $region12
      $region11: #{tpu_custom_call.1} parent=5 // pred_region
        %s117 = ssub.s32 %s14, 1
        // Predicated region
        $region13: #{tpu_custom_call.1} parent=11 // pred_check
          %p118 = pneg %p75
        $region14: #{tpu_custom_call.1} parent=11 // pred_check_branch
          %120 = sbr.rel (%p118) target = $region16
        $region15: #{tpu_custom_call.1} parent=11 // pred_region
          _
        $region16: #{tpu_custom_call.1} parent=11 // pred_fallthru
          _
      $region12: #{tpu_custom_call.1} parent=5 // pred_fallthru
        _
      %p121 = scmp.lt.s32.totalorder %s14, 2
      // Predicated region
      $region17: #{tpu_custom_call.1} parent=5 // pred_check
        %p122 = pneg %p121
      $region18: #{tpu_custom_call.1} parent=5 // pred_check_branch
        %124 = sbr.rel (%p122) target = $region20
      $region19: #{tpu_custom_call.1} parent=5 // pred_region
        // Predicated region
        $region21: #{tpu_custom_call.1} parent=19 // pred_check
          %p125 = pneg %p48
        $region22: #{tpu_custom_call.1} parent=19 // pred_check_branch
          %127 = sbr.rel (%p125) target = $region24
        $region23: #{tpu_custom_call.1} parent=19 // pred_region
          %s128 = sand.u32 %s38, 1
          %s129 = scalar_lea.sflag [#allocation3], %s128
          %s130 = sand.u32 %s38, 1
          %s131 = smul.addr %s130, 16
          %s132 = scalar_lea.vmem [#allocation2], %s131
          %s134 = ssub.s32 256, 256
          %135 = vsyncadd %s129, %s134
          %s136 = smul.addr %s21, 4
          %s137 = sadd.s32 %s22, %s136
          %s138 = smul.addr %s137, 64
          %s139 = scalar_lea.hbm %s0, %s138
          %s140 = sshll.u32 %s132, 4
          %s141 = int_to_ptr.vmem [resolvable:$true] %s140
          %146 = dma.hbm_to_vmem [thread:$0]  %s139, 256, %s141, %s129, 64, 64, 4
        $region24: #{tpu_custom_call.1} parent=19 // pred_fallthru
          _
      $region20: #{tpu_custom_call.1} parent=5 // pred_fallthru
        _
      %p147 = scmp.le.s32.totalorder 1, %s14
      %p148 = scmp.lt.s32.totalorder %s14, 3
      %p149 = pnand %p147, %p148
      %p150 = pneg %p149
      // Predicated region
      $region25: #{tpu_custom_call.1} parent=5 // pred_check
        _
      $region26: #{tpu_custom_call.1} parent=5 // pred_check_branch
        %152 = sbr.rel (%p149) target = $region28
      $region27: #{tpu_custom_call.1} parent=5 // pred_region
        %s153 = ssub.s32 %s14, 1
        %s154 = sand.u32 %s41, 1
        %s155 = scalar_lea.sflag [#allocation3], %s154
        %s156 = sand.u32 %s41, 1
        %s157 = smul.addr %s156, 16
        %s158 = scalar_lea.vmem [#allocation2], %s157
        // Predicated region
        $region29: #{tpu_custom_call.1} parent=27 // pred_check
          %p159 = pneg %p54
        $region30: #{tpu_custom_call.1} parent=27 // pred_check_branch
          %161 = sbr.rel (%p159) target = $region32
        $region31: #{tpu_custom_call.1} parent=27 // pred_region
          %162 = dma.done %s155, 256
        $region32: #{tpu_custom_call.1} parent=27 // pred_fallthru
          _
        %s163 = sand.u32 %s41, 1
        %s164 = scalar_lea.sflag [#allocation3], %s163
        %s165 = sand.u32 %s41, 1
        %s166 = smul.addr %s165, 16
        %s167 = scalar_lea.vmem [#allocation2], %s166
        %p168 = pneg %p54
        %p169 = pneg %p51
        %p170 = pneg %p75
        %p171 = pneg %p72
        %p172 = pneg %p103
        %p173 = pneg %p100
        %s174 = sand.u32 %s90, 1
        %s175 = scalar_lea.sflag [#allocation4], %s174
        %s176 = sand.u32 %s90, 1
        %s177 = smul.addr %s176, 16
        %s178 = scalar_lea.vmem [#allocation5], %s177
        %v179 = vld [vmem:[%s158] sm:$0xf]
        %v180 = vld [vmem:[%s158 + $0x4] sm:$0xf]
        %v181 = vld [vmem:[%s158 + $0x8] sm:$0xf]
        %v182 = vld [vmem:[%s158 + $0xc] sm:$0xf]
        %v183 = vld [vmem:[%s1] sm:$0x1]
        %v184 = vld [vmem:[%s1 + $0x1] sm:$0x1]
        %v185 = vld [vmem:[%s1 + $0x2] sm:$0x1]
        %v186 = vld [vmem:[%s1 + $0x3] sm:$0x1]
        %v187 = vmul.f32 %v179, %v179
        %v188 = vmul.f32 %v180, %v180
        %v189 = vmul.f32 %v181, %v181
        %v190 = vmul.f32 %v182, %v182
        %vm191 = vcmask 1043456
        %v192 = vsel %vm191, %v187, 0.0
        %v193 = vsel %vm191, %v188, 0.0
        %v194 = vadd.f32 %v192, %v193
        %v195 = vsel %vm191, %v189, 0.0
        %v196 = vadd.f32 %v194, %v195
        %v197 = vsel %vm191, %v190, 0.0
        %v198 = vadd.f32 %v196, %v197
        %v199 = vmax.f32 %v198, 1e-24
        %v200 = vrsqrt.pop %v199
        %v201 = vmul.f32 %v179, %v200
        %v202 = vmul.f32 %v180, %v200
        %v203 = vmul.f32 %v181, %v200
        %v204 = vmul.f32 %v182, %v200
        %v209 = vlaneseq
        %v210 = vshrl.u32 %v209, 7
        %v211 = vsub.s32 0, %v210
        %v212 = vrot.slane %v183, %v211
        %v213 = vlaneseq
        %v214 = vshrl.u32 %v213, 7
        %v215 = vsub.s32 0, %v214
        %v216 = vrot.slane %v184, %v215
        %v217 = vlaneseq
        %v218 = vshrl.u32 %v217, 7
        %v219 = vsub.s32 0, %v218
        %v220 = vrot.slane %v185, %v219
        %v221 = vlaneseq
        %v222 = vshrl.u32 %v221, 7
        %v223 = vsub.s32 0, %v222
        %v224 = vrot.slane %v186, %v223
        %225 = vset.pattern.permute.xlu0 0
        %226 = vperm.xlu0 %225, %v212
        %v227 = vpop.permute.xlu0 %226
        %229 = vset.pattern.permute.xlu0 0
        %230 = vperm.xlu0 %229, %v216
        %v231 = vpop.permute.xlu0 %230
        %233 = vset.pattern.permute.xlu0 0
        %234 = vperm.xlu0 %233, %v220
        %v235 = vpop.permute.xlu0 %234
        %237 = vset.pattern.permute.xlu0 0
        %238 = vperm.xlu0 %237, %v224
        %v239 = vpop.permute.xlu0 %238
        %v241 = vmul.f32 %v201, %v227
        %v242 = vmul.f32 %v202, %v231
        %v243 = vmul.f32 %v203, %v235
        %v244 = vmul.f32 %v204, %v239
        %245 = vst [vmem:[%s178] sm:$0xf] %v241
        %246 = vst [vmem:[%s178 + $0x4] sm:$0xf] %v242
        %247 = vst [vmem:[%s178 + $0x8] sm:$0xf] %v243
        %248 = vst [vmem:[%s178 + $0xc] sm:$0xf] %v244
        %s249 = sand.u32 %s90, 1
        %s250 = scalar_lea.sflag [#allocation4], %s249
        %s251 = sand.u32 %s90, 1
        %s252 = smul.addr %s251, 16
        %s253 = scalar_lea.vmem [#allocation5], %s252
        // Predicated region
        $region33: #{tpu_custom_call.1} parent=27 // pred_check
          %p254 = pneg %p100
        $region34: #{tpu_custom_call.1} parent=27 // pred_check_branch
          %256 = sbr.rel (%p254) target = $region36
        $region35: #{tpu_custom_call.1} parent=27 // pred_region
          %s258 = ssub.s32 256, 256
          %259 = vsyncadd %s250, %s258
          %s260 = smul.addr %s23, 4
          %s261 = sadd.s32 %s24, %s260
          %s262 = smul.addr %s261, 64
          %s263 = scalar_lea.hbm %s2, %s262
          %s264 = sshll.u32 %s253, 4
          %s265 = int_to_ptr.vmem [resolvable:$true] %s264
          %270 = dma.vmem_to_hbm [thread:$0]  %s265, 256, %s263, %s250, 64, 64, 4
        $region36: #{tpu_custom_call.1} parent=27 // pred_fallthru
          _
      $region28: #{tpu_custom_call.1} parent=5 // pred_fallthru
        _
      %p271 = scmp.le.s32.totalorder 2, %s14
      // Predicated region
      $region37: #{tpu_custom_call.1} parent=5 // pred_check
        %p272 = pneg %p271
      $region38: #{tpu_custom_call.1} parent=5 // pred_check_branch
        %274 = sbr.rel (%p272) target = $region40
      $region39: #{tpu_custom_call.1} parent=5 // pred_region
        %s275 = ssub.s32 %s14, 2
        // Predicated region
        $region41: #{tpu_custom_call.1} parent=39 // pred_check
          %p276 = pneg %p106
        $region42: #{tpu_custom_call.1} parent=39 // pred_check_branch
          %278 = sbr.rel (%p276) target = $region44
        $region43: #{tpu_custom_call.1} parent=39 // pred_region
          %s279 = sand.u32 %s91, 1
          %s280 = scalar_lea.sflag [#allocation4], %s279
          %s281 = sand.u32 %s91, 1
          %s282 = smul.addr %s281, 16
          %s283 = scalar_lea.vmem [#allocation5], %s282
          %284 = dma.done %s280, 256
        $region44: #{tpu_custom_call.1} parent=39 // pred_fallthru
          _
      $region40: #{tpu_custom_call.1} parent=5 // pred_fallthru
        _
    $region6: #{tpu_custom_call.1} parent=1 // loop_footer
      %s18 = sadd.s32 1, %s14
    $region7: #{tpu_custom_call.1} parent=1 // loop_footer_branch
      %13 = sbr.rel target = $region3
    $region8: #{tpu_custom_call.1} parent=1 // loop_exit
      _
    %285 = vsyncpa [#allocation3], 1
    %s286 = scalar_lea.sflag [#allocation3], 1
    %287 = vsyncpa %s286, 1
    %288 = vsyncpa [#allocation4], 1
    %s289 = scalar_lea.sflag [#allocation4], 1
    %290 = vsyncpa %s289, 1

</llo_original>
